<compile_context>
chip_gen: v7x
topology: tpu7x:2x2x1
jax: 0.10.0
libtpu: 0.0.40
codegen_flags: <defaults>
</compile_context>

<pallas_src>
import math

import jax
import jax.numpy as jnp
from jax.experimental import pallas as pl
from jax.experimental.pallas import tpu as pltpu


# --------------------------------------------------------------------------- #
# PE table (PyTorch __init__ equivalent — plain JAX setup glue)
# --------------------------------------------------------------------------- #
def _build_pe_table(d_model: int, max_len: int = 5000) -> jnp.ndarray:
    """Deterministic sinusoidal table, same math as the PyTorch __init__."""
    position = jnp.arange(0, max_len, dtype=jnp.float32)[:, None]            # (max_len, 1)
    div_term = jnp.exp(
        jnp.arange(0, d_model, 2, dtype=jnp.float32)
        * (-math.log(10000.0) / d_model)
    )                                                                         # (d_model/2,)
    pe = jnp.zeros((max_len, d_model), dtype=jnp.float32)
    pe = pe.at[:, 0::2].set(jnp.sin(position * div_term))
    pe = pe.at[:, 1::2].set(jnp.cos(position * div_term))
    return pe                                                                 # (max_len, d_model)


# --------------------------------------------------------------------------- #
# Kernel
# --------------------------------------------------------------------------- #
def _pe_add_kernel(x_ref, pe_ref, o_ref):
    # x_ref / o_ref: (g, k, tW) tile — g batch rows, each k-folded to (k, tW).
    # pe_ref: (k, tW) tile of the k-folded PE row, broadcast over the g rows.
    o_ref[...] = x_ref[...] + pe_ref[...][None, :, :]


# --------------------------------------------------------------------------- #
# Small integer helpers (trace-time Python ints only)
# --------------------------------------------------------------------------- #
def _cdiv(a: int, b: int) -> int:
    return -(-a // b)


def _round_up(a: int, b: int) -> int:
    return _cdiv(a, b) * b


def _round_down(a: int, b: int) -> int:
    return (a // b) * b


def _vmem_capacity_bytes() -> int:
    """Generation-keyed VMEM capacity; conservative fallback (v7x = 64 MiB)."""
    try:
        info = pltpu.get_tpu_info()
        return int(getattr(info, "vmem_capacity_bytes", 64 * 1024 * 1024))
    except Exception:
        return 64 * 1024 * 1024


# --------------------------------------------------------------------------- #
# Forward wrapper
# --------------------------------------------------------------------------- #
def positional_encoding_forward(
    x: jnp.ndarray,
    pe_table: jnp.ndarray,
    *,
    min_pallas_elems: int = 256 * 1024,
    target_tile_elems=None,
) -> jnp.ndarray:
    """x: (B, S, D).  Returns x + pe_table[None, :S, :] in the promoted dtype."""
    B, S, D = x.shape
    max_len, d_model = pe_table.shape
    assert S <= max_len, f"sequence length {S} exceeds PE table max_len {max_len}"
    assert d_model == D, f"d_model mismatch: x has {D}, pe_table has {d_model}"

    # PyTorch adds an f32 registered buffer, so the result follows type
    # promotion (f32 output for bf16/f16 inputs).  Make that explicit.
    cdt = jnp.promote_types(x.dtype, pe_table.dtype)
    pe_slice = pe_table[:S, :].astype(cdt)

    # Small-shape bypass: at tiny sizes the fixed pallas_call + per-step cost
    # dominates, and XLA will fuse this add with adjacent ops anyway.
    if B * S * D < min_pallas_elems:
        return x.astype(cdt) + pe_slice[None, :, :]

    itemsize = jnp.dtype(cdt).itemsize
    k = max(8, 32 // itemsize)                 # sublane fold: 8 (f32) / 16 (bf16)

    # --- VMEM budget (generation-keyed) --------------------------------------
    vmem_cap = _vmem_capacity_bytes()          # 64 MiB v7x, 128 MiB v5e/v6e
    vmem_limit = max(16 << 20,
                     min(_round_down(int(vmem_cap * 0.75), 1 << 20),
                         vmem_cap - (8 << 20)))
    if target_tile_elems is None:
        # x and out are double-buffered (4 big tiles) + pe (<= 2 tiles) +
        # headroom for the broadcast temp -> ~1/8 of the scoped limit per tile.
        target_tile_elems = max(64 * 1024, (vmem_limit // 8) // itemsize)

    # --- lane-dense, sublane-dense layout -------------------------------------
    # Flatten (S, D) -> C columns, then fold k sublanes out of the column axis
    # so both the x tile (g, k, tW) and the pe tile (k, tW) are (8,128)-dense.
    # Ragged shapes are zero-padded here; shapes with C % (k*128) == 0 and
    # small enough column extents pay no padding copy at all.
    C = S * D
    W0 = _round_up(_cdiv(C, k), 128)                       # cols per folded sub-row

    col_cap = max(128, _round_down(max(128, target_tile_elems // k), 128))
    n_col = max(1, _cdiv(W0, col_cap))
    tW = _round_up(_cdiv(W0, n_col), 128)                  # <= col_cap, 128-aligned
    W_pad = n_col * tW
    C_pad = k * W_pad

    rows_budget = max(1, target_tile_elems // (k * tW))    # batch rows per tile
    if B <= rows_budget:
        n_row, g = 1, B
    else:
        n_row = _cdiv(B, rows_budget)
        g = _cdiv(B, n_row)                                # pad waste <= (n_row-1)/B
    B_pad = n_row * g

    x2 = x.reshape(B, C).astype(cdt)
    pe2 = pe_slice.reshape(1, C)
    if C_pad != C or B_pad != B:
        x2 = jnp.pad(x2, ((0, B_pad - B), (0, C_pad - C)))
    if C_pad != C:
        pe2 = jnp.pad(pe2, ((0, 0), (0, C_pad - C)))
    x3 = x2.reshape(B_pad, k, W_pad)                       # free row-major split
    pe3 = pe2.reshape(k, W_pad)

    cost = pl.CostEstimate(
        flops=B_pad * C_pad,                               # one add per element
        transcendentals=0,
        bytes_accessed=(2 * B_pad * C_pad + C_pad) * itemsize,
    )

    out3 = pl.pallas_call(
        _pe_add_kernel,
        out_shape=jax.ShapeDtypeStruct((B_pad, k, W_pad), cdt),
        # Column tiles on the outer (slow) axis: the pe block index is constant
        # across the inner sweep over batch-row tiles, so its DMA is not
        # re-issued.  Both axes "parallel" for megacore sharding.
        # TODO(synk): on v7x, when n_col == 1 confirm via a trace that the
        # second parallel axis is the one sharded across the 2 TensorCores.
        grid=(n_col, n_row),
        in_specs=[
            pl.BlockSpec((g, k, tW), lambda j, b: (b, 0, j)),   # x tile
            pl.BlockSpec((k, tW), lambda j, b: (0, j)),         # pe tile
        ],
        out_specs=pl.BlockSpec((g, k, tW), lambda j, b: (b, 0, j)),
        compiler_params=pltpu.CompilerParams(
            dimension_semantics=("parallel", "parallel"),
            vmem_limit_bytes=int(vmem_limit),
        ),
        cost_estimate=cost,
    )(x3, pe3)

    out2 = out3.reshape(B_pad, C_pad)[:B, :C]
    # TODO(synk): in a real model, fuse this add into the adjacent embedding /
    # projection kernel (or donate x via input_output_aliases) so x does not
    # pay an extra full HBM read+write for a standalone elementwise op — that
    # fusion is the only remaining >=2x lever; this kernel is at the roofline.
    return out2.reshape(B, S, D)


# --------------------------------------------------------------------------- #
# Self-test
# --------------------------------------------------------------------------- #
if __name__ == "__main__":
    key = jax.random.PRNGKey(0)

    # Shapes consistent with the module: batch=2, seq=8, hidden=32.
    B, S, D = 2, 8, 32
    x = jax.random.normal(key, (B, S, D), dtype=jnp.float32)
    pe_table = _build_pe_table(d_model=D, max_len=5000)
    ref = x + pe_table[None, :S, :]

    # Normal path (small-shape bypass -> plain JAX add).
    out = jax.block_until_ready(positional_encoding_forward(x, pe_table))
    assert out.shape == (B, S, D)
    assert jnp.allclose(out, ref, atol=1e-6), "mismatch vs reference (bypass)"

    # Force the Pallas path on the same small shape (exercises column padding,
    # the k-fold layout, and a (1, 1) grid).
    out_p = jax.block_until_ready(
        positional_encoding_forward(x, pe_table, min_pallas_elems=0))
    assert jnp.allclose(out_p, ref, atol=1e-6), "mismatch vs reference (pallas)"

    # Non-128-divisible flattened width through the Pallas path.
    B2, S2, D2 = 3, 12, 20
    x_odd = jax.random.normal(jax.random.PRNGKey(1), (B2, S2, D2), jnp.float32)
    pe_odd = _build_pe_table(d_model=D2, max_len=64)
    out_odd = jax.block_until_ready(
        positional_encoding_forward(x_odd, pe_odd, min_pallas_elems=0))
    assert jnp.allclose(out_odd, x_odd + pe_odd[None, :S2, :], atol=1e-6), \
        "mismatch vs reference (odd shape)"

    # Multi row-tile grid with batch padding (tiny forced tile target).
    B3, S3, D3 = 5, 16, 64
    x_rows = jax.random.normal(jax.random.PRNGKey(2), (B3, S3, D3), jnp.float32)
    pe_rows = _build_pe_table(d_model=D3, max_len=128)
    out_rows = jax.block_until_ready(positional_encoding_forward(
        x_rows, pe_rows, min_pallas_elems=0, target_tile_elems=2048))
    assert jnp.allclose(out_rows, x_rows + pe_rows[None, :S3, :], atol=1e-6), \
        "mismatch vs reference (row-tiled)"

    # Multi column-tile grid (pe block index constant across inner batch axis).
    B4, S4, D4 = 2, 32, 128
    x_cols = jax.random.normal(jax.random.PRNGKey(3), (B4, S4, D4), jnp.float32)
    pe_cols = _build_pe_table(d_model=D4, max_len=128)
    out_cols = jax.block_until_ready(positional_encoding_forward(
        x_cols, pe_cols, min_pallas_elems=0, target_tile_elems=2048))
    assert jnp.allclose(out_cols, x_cols + pe_cols[None, :S4, :], atol=1e-6), \
        "mismatch vs reference (col-tiled)"

    print("KERNEL_OK")
</pallas_src>

<mosaic_0001>
module attributes {stable_mosaic.version = 11 : i64} {
  func.func @_pe_add_kernel(%arg0: i32, %arg1: i32, %arg2: memref<2x8x128xf32, #tpu.memory_space<vmem>>, %arg3: memref<8x128xf32, #tpu.memory_space<vmem>>, %arg4: memref<2x8x128xf32, #tpu.memory_space<vmem>>) attributes {dimension_semantics = [#tpu.dimension_semantics<parallel>, #tpu.dimension_semantics<parallel>], iteration_bounds = array<i64: 1, 1>, scalar_prefetch = 0 : i64, scratch_operands = 0 : i64, tpu.core_type = #tpu.core_type<tc>, window_params = [{transform_indices = @transform_0, window_bounds = array<i64: 2, 8, 128>}, {transform_indices = @transform_1, window_bounds = array<i64: 8, 128>}, {transform_indices = @transform_2, window_bounds = array<i64: 2, 8, 128>}]} {
    %c0 = arith.constant 0 : index
    %c0_0 = arith.constant 0 : index
    %c0_1 = arith.constant 0 : index
    %0 = vector.load %arg2[%c0, %c0_0, %c0_1] : memref<2x8x128xf32, #tpu.memory_space<vmem>>, vector<2x8x128xf32>
    %c0_2 = arith.constant 0 : index
    %c0_3 = arith.constant 0 : index
    %1 = vector.load %arg3[%c0_2, %c0_3] : memref<8x128xf32, #tpu.memory_space<vmem>>, vector<8x128xf32>
    %2 = vector.shape_cast %1 : vector<8x128xf32> to vector<1x8x128xf32>
    %3 = vector.broadcast %2 : vector<1x8x128xf32> to vector<2x8x128xf32>
    %4 = arith.addf %0, %3 : vector<2x8x128xf32>
    %c0_4 = arith.constant 0 : index
    %c0_5 = arith.constant 0 : index
    %c0_6 = arith.constant 0 : index
    %5 = vector.load %arg4[%c0_4, %c0_5, %c0_6] : memref<2x8x128xf32, #tpu.memory_space<vmem>>, vector<2x8x128xf32>
    tpu.vector_store %arg4[%c0_4, %c0_5, %c0_6], %4 {strides = array<i32>} : memref<2x8x128xf32, #tpu.memory_space<vmem>>, vector<2x8x128xf32>,
    return
  }
  func.func @transform_0(%arg0: i32, %arg1: i32) -> (i32, i32, i32) {
    %c0_i32 = arith.constant 0 : i32
    %c0_i32_0 = arith.constant 0 : i32
    return %arg1, %c0_i32, %arg0 : i32, i32, i32
  }
  func.func @transform_1(%arg0: i32, %arg1: i32) -> (i32, i32) {
    %c0_i32 = arith.constant 0 : i32
    %c0_i32_0 = arith.constant 0 : i32
    return %c0_i32, %arg0 : i32, i32
  }
  func.func @transform_2(%arg0: i32, %arg1: i32) -> (i32, i32, i32) {
    %c0_i32 = arith.constant 0 : i32
    %c0_i32_0 = arith.constant 0 : i32
    return %arg1, %c0_i32, %arg0 : i32, i32, i32
  }
}

</mosaic_0001>

<llo_original>
// kernel: tpu_custom_call.1
$region0: #{tpu_custom_call.1}
  #allocation0 [shape = 'u32[]', space=smem, size = 0x4, offset = 0x4, fixed_abs, tag = 'smem constant byte address 0x4 - core index']
  #allocation1 [shape = 'u32[144,128]{1,0:T(1,128)}', space=vmem, size = 0x12000, scoped, tag = 'internal scratch']
  %s0 = inlined_call_operand.hbm [shape: f32[2,8,128], index: 0, kind: input, shape index: {}]
  %s1 = inlined_call_operand.hbm [shape: f32[8,128], index: 1, kind: input, shape index: {}]
  %s2 = inlined_call_operand.hbm [shape: f32[2,8,128], index: 2, kind: output, shape index: {}]
  %s3 = sld [smem:[#allocation0]]
  $region26: #{tpu_custom_call.1} parent=0
    _
  %s5 = ssub.s32 1, %s3
  %s6 = scalar_select 0, %s5, %s3
  $region1: #{tpu_custom_call.1} parent=0
    #allocation2 [shape = 'u8[8192]{0}', space=vmem, size = 0x2000, scoped, tag = 'input window, operand 0, single buffered']
    #allocation3 [shape = 's32[1]{0}', space=sflag, size = 0x4, scoped, tag = 'scoped memory for tpu_custom_call.1']
    #allocation4 [shape = 's32[1]{0}', space=sflag, size = 0x4, scoped, tag = 'scoped memory for tpu_custom_call.1']
    #allocation5 [shape = 'u8[4096]{0}', space=vmem, size = 0x1000, scoped, tag = 'input window, operand 1, single buffered']
    #allocation6 [shape = 's32[1]{0}', space=sflag, size = 0x4, scoped, tag = 'scoped memory for tpu_custom_call.1']
    #allocation7 [shape = 'u8[8192]{0}', space=vmem, size = 0x2000, scoped, tag = 'output window, operand 0, single buffered']
    %7 = vsyncpa [#allocation3], 0
    %8 = vsyncpa [#allocation6], 0
    %9 = vsyncpa [#allocation4], 0
    // Predicated region
    $region2: #{tpu_custom_call.1} parent=1 // pred_check
      _
    $region3: #{tpu_custom_call.1} parent=1 // pred_check_branch
      %11 = sbr.rel (0) target = $region5
    $region4: #{tpu_custom_call.1} parent=1 // pred_region
      %s13 = ssub.s32 256, 256
      %14 = vsyncadd [#allocation3], %s13
      %s15 = sshll.u32 [#allocation2], 4
      %s16 = int_to_ptr.vmem [resolvable:$true] %s15
      %21 = dma.hbm_to_vmem [thread:$0]  %s0, 256, %s16, [#allocation3], 128, 128, 8
    $region5: #{tpu_custom_call.1} parent=1 // pred_fallthru
      _
    // Predicated region
    $region6: #{tpu_custom_call.1} parent=1 // pred_check
      _
    $region7: #{tpu_custom_call.1} parent=1 // pred_check_branch
      %23 = sbr.rel (0) target = $region9
    $region8: #{tpu_custom_call.1} parent=1 // pred_region
      %s25 = ssub.s32 128, 128
      %26 = vsyncadd [#allocation6], %s25
      %s28 = sshll.u32 [#allocation5], 4
      %s29 = int_to_ptr.vmem [resolvable:$true] %s28
      %31 = dma.hbm_to_vmem [thread:$0]  %s1, 128, %s29, [#allocation6]
    $region9: #{tpu_custom_call.1} parent=1 // pred_fallthru
      _
    // Predicated region
    $region10: #{tpu_custom_call.1} parent=1 // pred_check
      _
    $region11: #{tpu_custom_call.1} parent=1 // pred_check_branch
      %33 = sbr.rel (0) target = $region13
    $region12: #{tpu_custom_call.1} parent=1 // pred_region
      %34 = dma.done [#allocation3], 256
    $region13: #{tpu_custom_call.1} parent=1 // pred_fallthru
      _
    // Predicated region
    $region14: #{tpu_custom_call.1} parent=1 // pred_check
      _
    $region15: #{tpu_custom_call.1} parent=1 // pred_check_branch
      %36 = sbr.rel (0) target = $region17
    $region16: #{tpu_custom_call.1} parent=1 // pred_region
      %37 = dma.done [#allocation6], 128
    $region17: #{tpu_custom_call.1} parent=1 // pred_fallthru
      _
    %v38 = vld [vmem:[#allocation2] sm:$0xff]
    %v39 = vld [vmem:[#allocation2 + $0x8] sm:$0xff]
    %v40 = vld [vmem:[#allocation5] sm:$0xff]
    %v41 = vadd.f32 %v38, %v40
    %v42 = vadd.f32 %v39, %v40
    %43 = vst [vmem:[#allocation7] sm:$0xff] %v41
    %44 = vst [vmem:[#allocation7 + $0x8] sm:$0xff] %v42
    // Predicated region
    $region18: #{tpu_custom_call.1} parent=1 // pred_check
      _
    $region19: #{tpu_custom_call.1} parent=1 // pred_check_branch
      %46 = sbr.rel (0) target = $region21
    $region20: #{tpu_custom_call.1} parent=1 // pred_region
      %s48 = ssub.s32 256, 256
      %49 = vsyncadd [#allocation4], %s48
      %s50 = sshll.u32 [#allocation7], 4
      %s51 = int_to_ptr.vmem [resolvable:$true] %s50
      %56 = dma.vmem_to_hbm [thread:$0]  %s51, 256, %s2, [#allocation4], 128, 128, 8
    $region21: #{tpu_custom_call.1} parent=1 // pred_fallthru
      _
    // Predicated region
    $region22: #{tpu_custom_call.1} parent=1 // pred_check
      _
    $region23: #{tpu_custom_call.1} parent=1 // pred_check_branch
      %58 = sbr.rel (0) target = $region25
    $region24: #{tpu_custom_call.1} parent=1 // pred_region
      %59 = dma.done [#allocation4], 256
    $region25: #{tpu_custom_call.1} parent=1 // pred_fallthru
      _
    %60 = vsyncpa [#allocation3], 1
    %61 = vsyncpa [#allocation6], 1
    %62 = vsyncpa [#allocation4], 1

</llo_original>
